<compile_context>
chip_gen: v6e
topology: v6e:2x2x1
jax: 0.10.0
libtpu: 0.0.40
codegen_flags: <defaults>
</compile_context>

<pallas_src>
from functools import partial

import numpy as np
import jax
import jax.numpy as jnp
from jax.experimental import pallas as pl
from jax.experimental.pallas import tpu as pltpu


def _round_up(x, m):
    return (x + m - 1) // m * m


# ---------------------------------------------------------------------------
# Pallas kernel: fused tag-predictor (both branches) + per-token NLL.
# ---------------------------------------------------------------------------
def _other_model_kernel(x_ref, code_ref, w1t_ref, wcol_ref, cb_ref, out_ref):
    # x_ref    : (TN, H) bf16  hidden tokens, natural layout
    # code_ref : (1, TN) f32   bit-coded: table_mask + 2*para_mask + 4*tags
    # w1t_ref  : (H, H)  bf16  fc1 weight, (out, in)
    # wcol_ref : (H, 8)  f32   col0 = fc1 bias, col1 = centered ln_g*w2diff
    # cb_ref   : (1, 1)  f32   SMEM: sum(ln_b*w2diff) + (b2[1]-b2[0])
    # out_ref  : (8, TN) f32   rows 0/1 table logp0/logp1, 2/3 paragraph,
    #                          4 per-token NLL contribution, 5..7 zero
    x = x_ref[...]
    H = x.shape[1]

    b1 = wcol_ref[:, 0:1]       # (H, 1) fc1 bias
    gwc = wcol_ref[:, 1:2]      # (H, 1) centered (ln_g * w2diff)

    # fc1 with the output transposed (tokens on lanes): contract the last dims
    # of both operands (QK^T-style MXU path, no explicit transpose needed).
    h = jax.lax.dot_general(
        w1t_ref[...], x,
        dimension_numbers=(((1,), (1,)), ((), ())),
        preferred_element_type=jnp.float32) + b1             # (H, TN) f32

    # gelu (BERT tanh approximation), f32 on VPU/EUP.
    h = 0.5 * h * (1.0 + jnp.tanh(0.7978845608028654 *
                                  (h + 0.044715 * h * h * h)))

    # LayerNorm + fc2 class-diff projection, folded into 3 sublane reductions:
    #   d = rsqrt(var + eps) * sum_i gwc_i * h_i + cb
    inv_h = 1.0 / H
    mu = jnp.sum(h, axis=0, keepdims=True) * inv_h            # (1, TN)
    s2 = jnp.sum(h * h, axis=0, keepdims=True) * inv_h        # E[h^2]
    sgc = jnp.sum(gwc * h, axis=0, keepdims=True)             # (1, TN)
    var = s2 - mu * mu
    d = jax.lax.rsqrt(var + 1e-5) * sgc + cb_ref[0, 0]        # logit1 - logit0

    # 2-class log-softmax: logp1 = -softplus(-d), logp0 = -softplus(d).
    sp = jnp.maximum(d, 0.0) + jnp.log(1.0 + jnp.exp(-jnp.abs(d)))
    logp1 = d - sp
    logp0 = -sp

    # Decode bit-coded masks/tags.
    c = code_ref[...]
    tg_b = c >= 4.0
    c = c - 4.0 * tg_b.astype(jnp.float32)
    pm_b = c >= 2.0
    c = c - 2.0 * pm_b.astype(jnp.float32)
    tm_b = c >= 1.0
    tm = tm_b.astype(jnp.float32)
    pm = pm_b.astype(jnp.float32)

    # Mask predictions per branch (util.replace_masked_values(..., mask, 0)).
    t0 = logp0 * tm
    t1 = logp1 * tm
    p0 = logp0 * pm
    p1 = logp1 * pm

    # NLLLoss(reduction='sum') with labels = (tags * mask).long():
    # masked tokens pick class 0 whose masked logp is exactly 0.
    picked_t = jnp.where(tg_b & tm_b, t1, t0)
    picked_p = jnp.where(tg_b & pm_b, p1, p0)
    nll = -(picked_t + picked_p)

    z = jnp.zeros_like(nll)
    out_ref[...] = jnp.concatenate([t0, t1, p0, p1, nll, z, z, z], axis=0)


# ---------------------------------------------------------------------------
# pallas_call wrapper
# ---------------------------------------------------------------------------
def _vmem_limit_bytes(tn, H):
    est = (2 * tn * H * 2          # x tile, double-buffered, bf16
           + 2 * tn * 4            # code row, double-buffered, f32
           + 2 * H * H * 2         # w1t (constant index, default buffering)
           + 2 * H * 8 * 4         # wcol
           + 2 * 8 * tn * 4        # out tile, double-buffered, f32
           + 5 * H * tn * 4)       # f32 intermediates (h, gelu temps) headroom
    return int(min(64 * 2 ** 20, max(16 * 2 ** 20, est * 3 // 2)))


def other_model_pallas(x, code, w1t, wcol, cb, *, tn):
    """x: (N_pad, H) bf16; code: (1, N_pad) f32; weights preprocessed."""
    n_pad, H = x.shape
    assert tn % 128 == 0 and n_pad % tn == 0
    grid = (n_pad // tn,)

    flops = 2 * n_pad * H * H + 12 * n_pad * H
    transcendentals = n_pad * H + 3 * n_pad
    bytes_accessed = (n_pad * H * 2 + n_pad * 4 + 8 * n_pad * 4 +
                      H * H * 2 + H * 8 * 4 + 4)

    return pl.pallas_call(
        _other_model_kernel,
        out_shape=jax.ShapeDtypeStruct((8, n_pad), jnp.float32),
        grid=grid,
        in_specs=[
            pl.BlockSpec((tn, H), lambda i: (i, 0)),      # hidden, natural layout
            pl.BlockSpec((1, tn), lambda i: (0, i)),      # bit-coded masks/tags
            pl.BlockSpec((H, H), lambda i: (0, 0)),       # fc1 weight (resident)
            pl.BlockSpec((H, 8), lambda i: (0, 0)),       # packed b1 / gwc
            pl.BlockSpec(memory_space=pltpu.MemorySpace.SMEM),  # cb scalar
        ],
        out_specs=pl.BlockSpec((8, tn), lambda i: (0, i)),
        compiler_params=pltpu.CompilerParams(
            dimension_semantics=("parallel",),
            vmem_limit_bytes=_vmem_limit_bytes(tn, H)),
        cost_estimate=pl.CostEstimate(
            flops=flops, transcendentals=transcendentals,
            bytes_accessed=bytes_accessed),
    )(x, code, w1t, wcol, cb)


def prepare_params(params):
    """One-time weight preprocessing: transpose / pack / fold LN into fc2."""
    w1 = jnp.asarray(params["w1"], jnp.float32)           # (H_in, H_out): x @ w1
    H = w1.shape[0]
    w1t = w1.T.astype(jnp.bfloat16)                        # (H_out, H_in) bf16
    b1 = jnp.asarray(params["b1"], jnp.float32).reshape(H)
    g = jnp.asarray(params["ln_g"], jnp.float32).reshape(H)
    be = jnp.asarray(params["ln_b"], jnp.float32).reshape(H)
    w2 = jnp.asarray(params["w2"], jnp.float32)            # (H, 2)
    b2 = jnp.asarray(params["b2"], jnp.float32).reshape(-1)

    w2d = w2[:, 1] - w2[:, 0]                              # class-diff row (H,)
    gw = g * w2d
    gwc = gw - jnp.mean(gw)                                # centers out the -mu*sum(gw) term
    cb = (jnp.sum(be * w2d) + (b2[1] - b2[0])).reshape(1, 1)

    wcol = jnp.stack([b1, gwc] + [jnp.zeros_like(b1)] * 6, axis=1)  # (H, 8)
    return {"w1t": w1t, "wcol": wcol, "cb": cb}


# ---------------------------------------------------------------------------
# Tiling heuristics (>=2 tiles whenever possible -> both v7x TCs busy).
# ---------------------------------------------------------------------------
def _choose_tiling(n, tile_rows):
    n_pad = _round_up(max(n, 1), 256)
    tn = min(_round_up(tile_rows, 128), n_pad // 2)
    tn = max(tn, 128)
    while n_pad % tn:
        tn -= 128
    return n_pad, tn


# ---------------------------------------------------------------------------
# Single jitted path: cast/pad/bit-code -> pallas kernel -> unpack + loss sum.
# ---------------------------------------------------------------------------
@partial(jax.jit, static_argnames=("tile_rows",))
def _fused_forward(hidden, table_mask, para_mask, tags, w1t, wcol, cb, *,
                   tile_rows=1024):
    B, L, H = hidden.shape
    N = B * L
    n_pad, tn = _choose_tiling(N, tile_rows)

    x = jnp.pad(hidden.astype(jnp.bfloat16).reshape(N, H),
                ((0, n_pad - N), (0, 0)))
    code = (table_mask.reshape(-1) + 2.0 * para_mask.reshape(-1) +
            4.0 * tags.reshape(-1)).astype(jnp.float32)
    code = jnp.pad(code, (0, n_pad - N)).reshape(1, n_pad)

    out = other_model_pallas(x, code, w1t, wcol, cb, tn=tn)

    table_pred = jnp.transpose(out[0:2, :N].reshape(2, B, L), (1, 0, 2))
    para_pred = jnp.transpose(out[2:4, :N].reshape(2, B, L), (1, 0, 2))
    other_loss = jnp.sum(out[4, :])          # padded columns contribute 0
    return other_loss, table_pred, para_pred


# ---------------------------------------------------------------------------
# Plain-JAX reference (PyTorch-faithful two-branch version) — debug only.
# ---------------------------------------------------------------------------
def _reference(x2d, table_mask, para_mask, tags, params):
    w1 = jnp.asarray(params["w1"], jnp.float32)
    b1 = jnp.asarray(params["b1"], jnp.float32).reshape(1, -1)
    g = jnp.asarray(params["ln_g"], jnp.float32).reshape(1, -1)
    be = jnp.asarray(params["ln_b"], jnp.float32).reshape(1, -1)
    w2 = jnp.asarray(params["w2"], jnp.float32)
    b2 = jnp.asarray(params["b2"], jnp.float32).reshape(1, -1)

    def branch(mask):
        xm = x2d * mask
        h = xm @ w1 + b1
        h = 0.5 * h * (1.0 + jnp.tanh(0.7978845608028654 *
                                      (h + 0.044715 * h ** 3)))
        mu = jnp.mean(h, axis=-1, keepdims=True)
        var = jnp.mean((h - mu) ** 2, axis=-1, keepdims=True)
        h = (h - mu) / jnp.sqrt(var + 1e-5) * g + be
        logits = h @ w2 + b2
        logp = jax.nn.log_softmax(logits, axis=-1) * mask
        labels = tags * mask
        picked = jnp.where(labels > 0.5, logp[:, 1:2], logp[:, 0:1])
        return logp, -jnp.sum(picked)

    t_logp, t_loss = branch(table_mask)
    p_logp, p_loss = branch(para_mask)
    return t_logp, p_logp, t_loss + p_loss


# ---------------------------------------------------------------------------
# "OtherModel.forward": batch-dict preprocessing (numpy) + fused jit hot path.
# ---------------------------------------------------------------------------
def other_model_forward(sequence_output, hidden, batch, other_labels, params,
                        *, tile_rows=1024, debug_check=False):
    del sequence_output  # unused by the reference forward()
    sel = np.asarray(other_labels, dtype=bool)
    hidden = np.asarray(hidden, np.float32)
    batch_size = hidden.shape[0]

    q_lens = np.asarray(batch["lens"]["question"])[sel]
    t_lens = np.asarray(batch["lens"]["table"])[sel]
    p_lens = np.asarray(batch["lens"]["paragraph"])[sel]
    b_lens = [int(q_lens[i] + t_lens[i] + p_lens[i]) for i in range(batch_size)]
    max_len = max(b_lens)
    if max_len != hidden.shape[1]:
        hidden = hidden[:, :max_len, :]

    table_mask = np.asarray(batch["mask"]["table"])[sel][:, :max_len].astype(np.float32)
    para_mask = np.asarray(batch["mask"]["paragraph"])[sel][:, :max_len].astype(np.float32)
    tags = np.asarray(batch["b_tags"])[sel][:, :max_len].astype(np.float32)

    prep = prepare_params(params)

    other_loss, table_pred, para_pred = _fused_forward(
        jnp.asarray(hidden), jnp.asarray(table_mask), jnp.asarray(para_mask),
        jnp.asarray(tags), prep["w1t"], prep["wcol"], prep["cb"],
        tile_rows=tile_rows)

    if debug_check:
        B, L, H = hidden.shape
        N = B * L
        x2d = jnp.asarray(hidden, jnp.float32).reshape(N, H)
        tm1 = jnp.asarray(table_mask).reshape(N, 1)
        pm1 = jnp.asarray(para_mask).reshape(N, 1)
        tg1 = jnp.asarray(tags).reshape(N, 1)
        t_ref, p_ref, l_ref = _reference(x2d, tm1, pm1, tg1, params)
        got_t = np.asarray(jnp.transpose(table_pred, (0, 2, 1)).reshape(N, 2))
        got_p = np.asarray(jnp.transpose(para_pred, (0, 2, 1)).reshape(N, 2))
        np.testing.assert_allclose(got_t, np.asarray(t_ref), atol=5e-2, rtol=5e-2)
        np.testing.assert_allclose(got_p, np.asarray(p_ref), atol=5e-2, rtol=5e-2)
        np.testing.assert_allclose(float(other_loss), float(l_ref),
                                   atol=1e-1, rtol=2e-2)

    return other_loss, table_pred, para_pred


# ---------------------------------------------------------------------------
if __name__ == "__main__":
    H = 32            # hidden_size
    L_full = 16       # padded sequence length in the batch dict
    B_full = 3        # full mini-batch size
    other_labels = [1, 0, 1]
    B = sum(other_labels)

    key = jax.random.PRNGKey(0)
    k1, k2, k3, k4, k5 = jax.random.split(key, 5)

    # FFNLayer params: Linear(H,H) -> gelu -> LayerNorm(H) -> Linear(H,2)
    params = {
        "w1": 0.05 * jax.random.normal(k1, (H, H), jnp.float32),
        "b1": 0.01 * jax.random.normal(k2, (1, H), jnp.float32),
        "ln_g": jnp.ones((1, H), jnp.float32),
        "ln_b": jnp.zeros((1, H), jnp.float32),
        "w2": 0.05 * jax.random.normal(k3, (H, 2), jnp.float32),
        "b2": 0.01 * jax.random.normal(k4, (1, 2), jnp.float32),
    }

    # hidden for the `other_labels == 1` subset
    hidden = np.asarray(jax.random.normal(k5, (B, L_full, H), jnp.float32))
    sequence_output = hidden.copy()   # unused by forward(); signature parity

    # Batch dict (lens / masks / tags for the FULL mini-batch).
    q_lens_full = np.array([4, 5, 3], np.int32)
    t_lens_full = np.array([4, 3, 4], np.int32)
    p_lens_full = np.array([4, 2, 3], np.int32)

    def make_masks(q, t, p):
        qm = np.zeros((L_full,), np.float32); qm[:q] = 1
        tm = np.zeros((L_full,), np.float32); tm[q:q + t] = 1
        pm = np.zeros((L_full,), np.float32); pm[q + t:q + t + p] = 1
        bm = np.zeros((L_full,), np.float32); bm[:q + t + p] = 1
        return qm, tm, pm, bm

    qms, tms, pms, bms = zip(*[make_masks(q_lens_full[i], t_lens_full[i],
                                          p_lens_full[i]) for i in range(B_full)])
    rng = np.random.RandomState(0)
    b_tags = (rng.rand(B_full, L_full) > 0.5).astype(np.float32) * np.stack(bms)

    batch = {
        "lens": {"question": q_lens_full, "table": t_lens_full,
                 "paragraph": p_lens_full},
        "mask": {"question": np.stack(qms), "table": np.stack(tms),
                 "paragraph": np.stack(pms), "b": np.stack(bms)},
        "b_tags": b_tags,
    }

    other_loss, table_pred, para_pred = other_model_forward(
        sequence_output, hidden, batch, other_labels, params, debug_check=True)
    jax.block_until_ready((other_loss, table_pred, para_pred))
    print("KERNEL_OK")
</pallas_src>

<mosaic_0001>
module attributes {stable_mosaic.version = 11 : i64} {
  func.func @_other_model_kernel(%arg0: i32, %arg1: memref<128x32xbf16, #tpu.memory_space<vmem>>, %arg2: memref<1x128xf32, #tpu.memory_space<vmem>>, %arg3: memref<32x32xbf16, #tpu.memory_space<vmem>>, %arg4: memref<32x8xf32, #tpu.memory_space<vmem>>, %arg5: memref<1x1xf32, #tpu.memory_space<smem>>, %arg6: memref<8x128xf32, #tpu.memory_space<vmem>>) attributes {dimension_semantics = [#tpu.dimension_semantics<parallel>], iteration_bounds = array<i64: 2>, scalar_prefetch = 0 : i64, scratch_operands = 0 : i64, tpu.core_type = #tpu.core_type<tc>, window_params = [{transform_indices = @transform_0, window_bounds = array<i64: 128, 32>}, {transform_indices = @transform_1, window_bounds = array<i64: 1, 128>}, {pipeline_mode = #tpu.pipeline_mode<synchronous>, transform_indices = @transform_2, window_bounds = array<i64: 32, 32>}, {pipeline_mode = #tpu.pipeline_mode<synchronous>, transform_indices = @transform_3, window_bounds = array<i64: 32, 8>}, {transform_indices = @transform_4, window_bounds = array<i64: 1, 1>}, {transform_indices = @transform_5, window_bounds = array<i64: 8, 128>}]} {
    %c0 = arith.constant 0 : index
    %c0_0 = arith.constant 0 : index
    %0 = vector.load %arg1[%c0, %c0_0] : memref<128x32xbf16, #tpu.memory_space<vmem>>, vector<128x32xbf16>
    %c0_1 = arith.constant 0 : index
    %c0_2 = arith.constant 0 : index
    %1 = vector.load %arg4[%c0_1, %c0_2] : memref<32x8xf32, #tpu.memory_space<vmem>>, vector<32x1xf32>
    %c0_3 = arith.constant 0 : index
    %c1 = arith.constant 1 : index
    %2 = vector.load %arg4[%c0_3, %c1] : memref<32x8xf32, #tpu.memory_space<vmem>>, vector<32x1xf32>
    %c0_4 = arith.constant 0 : index
    %c0_5 = arith.constant 0 : index
    %3 = vector.load %arg3[%c0_4, %c0_5] : memref<32x32xbf16, #tpu.memory_space<vmem>>, vector<32x32xbf16>
    %cst = arith.constant dense<0.000000e+00> : vector<32x128xf32>
    %4 = tpu.matmul %3, %0, %cst {dimension_numbers = #tpu.dot_dimension_numbers<[1], [1], [0], [0], [0, 0, 1, 0], [], []>} : vector<32x32xbf16>, vector<128x32xbf16>, vector<32x128xf32> -> vector<32x128xf32>
    %5 = vector.broadcast %1 : vector<32x1xf32> to vector<32x128xf32>
    %6 = arith.addf %4, %5 : vector<32x128xf32>
    %cst_6 = arith.constant 5.000000e-01 : f32
    %7 = vector.broadcast %cst_6 : f32 to vector<32x128xf32>
    %8 = arith.mulf %7, %6 : vector<32x128xf32>
    %cst_7 = arith.constant 4.471500e-02 : f32
    %9 = vector.broadcast %cst_7 : f32 to vector<32x128xf32>
    %10 = arith.mulf %9, %6 : vector<32x128xf32>
    %11 = arith.mulf %10, %6 : vector<32x128xf32>
    %12 = arith.mulf %11, %6 : vector<32x128xf32>
    %13 = arith.addf %6, %12 : vector<32x128xf32>
    %cst_8 = arith.constant 0.797884583 : f32
    %14 = vector.broadcast %cst_8 : f32 to vector<32x128xf32>
    %15 = arith.mulf %14, %13 : vector<32x128xf32>
    %16 = math.tanh %15 : vector<32x128xf32>
    %cst_9 = arith.constant 1.000000e+00 : f32
    %17 = vector.broadcast %cst_9 : f32 to vector<32x128xf32>
    %18 = arith.addf %17, %16 : vector<32x128xf32>
    %19 = arith.mulf %8, %18 : vector<32x128xf32>
    %cst_10 = arith.constant dense<0.000000e+00> : vector<128xf32>
    %20 = vector.multi_reduction <add>, %19, %cst_10 [0] : vector<32x128xf32> to vector<128xf32>
    %21 = vector.shape_cast %20 : vector<128xf32> to vector<1x128xf32>
    %cst_11 = arith.constant 3.125000e-02 : f32
    %22 = vector.broadcast %cst_11 : f32 to vector<1x128xf32>
    %23 = arith.mulf %21, %22 : vector<1x128xf32>
    %24 = arith.mulf %19, %19 : vector<32x128xf32>
    %cst_12 = arith.constant dense<0.000000e+00> : vector<128xf32>
    %25 = vector.multi_reduction <add>, %24, %cst_12 [0] : vector<32x128xf32> to vector<128xf32>
    %26 = vector.shape_cast %25 : vector<128xf32> to vector<1x128xf32>
    %cst_13 = arith.constant 3.125000e-02 : f32
    %27 = vector.broadcast %cst_13 : f32 to vector<1x128xf32>
    %28 = arith.mulf %26, %27 : vector<1x128xf32>
    %29 = vector.broadcast %2 : vector<32x1xf32> to vector<32x128xf32>
    %30 = arith.mulf %29, %19 : vector<32x128xf32>
    %cst_14 = arith.constant dense<0.000000e+00> : vector<128xf32>
    %31 = vector.multi_reduction <add>, %30, %cst_14 [0] : vector<32x128xf32> to vector<128xf32>
    %32 = vector.shape_cast %31 : vector<128xf32> to vector<1x128xf32>
    %33 = arith.mulf %23, %23 : vector<1x128xf32>
    %34 = arith.subf %28, %33 : vector<1x128xf32>
    %cst_15 = arith.constant 9.99999974E-6 : f32
    %35 = vector.broadcast %cst_15 : f32 to vector<1x128xf32>
    %36 = arith.addf %34, %35 : vector<1x128xf32>
    %37 = math.rsqrt %36 : vector<1x128xf32>
    %38 = arith.mulf %37, %32 : vector<1x128xf32>
    %c0_16 = arith.constant 0 : index
    %c0_17 = arith.constant 0 : index
    %39 = memref.load %arg5[%c0_16, %c0_17] : memref<1x1xf32, #tpu.memory_space<smem>>
    %40 = vector.broadcast %39 : f32 to vector<1x128xf32>
    %41 = arith.addf %38, %40 : vector<1x128xf32>
    %cst_18 = arith.constant 0.000000e+00 : f32
    %42 = vector.broadcast %cst_18 : f32 to vector<1x128xf32>
    %43 = arith.maximumf %41, %42 : vector<1x128xf32>
    %44 = math.absf %41 : vector<1x128xf32>
    %cst_19 = arith.constant 0.000000e+00 : f32
    %45 = vector.broadcast %cst_19 : f32 to vector<1x128xf32>
    %46 = arith.subf %45, %44 : vector<1x128xf32>
    %47 = math.exp %46 : vector<1x128xf32>
    %cst_20 = arith.constant 1.000000e+00 : f32
    %48 = vector.broadcast %cst_20 : f32 to vector<1x128xf32>
    %49 = arith.addf %48, %47 : vector<1x128xf32>
    %50 = math.log %49 : vector<1x128xf32>
    %51 = arith.addf %43, %50 : vector<1x128xf32>
    %52 = arith.subf %41, %51 : vector<1x128xf32>
    %cst_21 = arith.constant 0.000000e+00 : f32
    %53 = vector.broadcast %cst_21 : f32 to vector<1x128xf32>
    %54 = arith.subf %53, %51 : vector<1x128xf32>
    %c0_22 = arith.constant 0 : index
    %c0_23 = arith.constant 0 : index
    %55 = vector.load %arg2[%c0_22, %c0_23] : memref<1x128xf32, #tpu.memory_space<vmem>>, vector<1x128xf32>
    %cst_24 = arith.constant 4.000000e+00 : f32
    %56 = vector.broadcast %cst_24 : f32 to vector<1x128xf32>
    %57 = arith.cmpf oge, %55, %56 : vector<1x128xf32>
    %58 = arith.extui %57 : vector<1x128xi1> to vector<1x128xi32>
    %59 = arith.sitofp %58 : vector<1x128xi32> to vector<1x128xf32>
    %cst_25 = arith.constant 4.000000e+00 : f32
    %60 = vector.broadcast %cst_25 : f32 to vector<1x128xf32>
    %61 = arith.mulf %60, %59 : vector<1x128xf32>
    %62 = arith.subf %55, %61 : vector<1x128xf32>
    %cst_26 = arith.constant 2.000000e+00 : f32
    %63 = vector.broadcast %cst_26 : f32 to vector<1x128xf32>
    %64 = arith.cmpf oge, %62, %63 : vector<1x128xf32>
    %65 = arith.extui %64 : vector<1x128xi1> to vector<1x128xi32>
    %66 = arith.sitofp %65 : vector<1x128xi32> to vector<1x128xf32>
    %cst_27 = arith.constant 2.000000e+00 : f32
    %67 = vector.broadcast %cst_27 : f32 to vector<1x128xf32>
    %68 = arith.mulf %67, %66 : vector<1x128xf32>
    %69 = arith.subf %62, %68 : vector<1x128xf32>
    %cst_28 = arith.constant 1.000000e+00 : f32
    %70 = vector.broadcast %cst_28 : f32 to vector<1x128xf32>
    %71 = arith.cmpf oge, %69, %70 : vector<1x128xf32>
    %72 = arith.extui %71 : vector<1x128xi1> to vector<1x128xi32>
    %73 = arith.sitofp %72 : vector<1x128xi32> to vector<1x128xf32>
    %74 = arith.extui %64 : vector<1x128xi1> to vector<1x128xi32>
    %75 = arith.sitofp %74 : vector<1x128xi32> to vector<1x128xf32>
    %76 = arith.mulf %54, %73 : vector<1x128xf32>
    %77 = arith.mulf %52, %73 : vector<1x128xf32>
    %78 = arith.mulf %54, %75 : vector<1x128xf32>
    %79 = arith.mulf %52, %75 : vector<1x128xf32>
    %80 = arith.andi %57, %71 : vector<1x128xi1>
    %81 = arith.select %80, %77, %76 : vector<1x128xi1>, vector<1x128xf32>
    %82 = arith.andi %57, %64 : vector<1x128xi1>
    %83 = arith.select %82, %79, %78 : vector<1x128xi1>, vector<1x128xf32>
    %84 = arith.addf %81, %83 : vector<1x128xf32>
    %cst_29 = arith.constant 0.000000e+00 : f32
    %85 = vector.broadcast %cst_29 : f32 to vector<1x128xf32>
    %86 = arith.subf %85, %84 : vector<1x128xf32>
    %cst_30 = arith.constant 0.000000e+00 : f32
    %87 = vector.broadcast %cst_30 : f32 to vector<1x128xf32>
    %88 = tpu.concatenate %76, %77, %78, %79, %86, %87, %87, %87 in 0 : vector<1x128xf32>, vector<1x128xf32>, vector<1x128xf32>, vector<1x128xf32>, vector<1x128xf32>, vector<1x128xf32>, vector<1x128xf32>, vector<1x128xf32> -> vector<8x128xf32>
    %c0_31 = arith.constant 0 : index
    %c0_32 = arith.constant 0 : index
    %89 = vector.load %arg6[%c0_31, %c0_32] : memref<8x128xf32, #tpu.memory_space<vmem>>, vector<8x128xf32>
    tpu.vector_store %arg6[%c0_31, %c0_32], %88 {strides = array<i32>} : memref<8x128xf32, #tpu.memory_space<vmem>>, vector<8x128xf32>,
    return
  }
  func.func @transform_0(%arg0: i32) -> (i32, i32) {
    %c0_i32 = arith.constant 0 : i32
    %c0_i32_0 = arith.constant 0 : i32
    return %arg0, %c0_i32 : i32, i32
  }
  func.func @transform_1(%arg0: i32) -> (i32, i32) {
    %c0_i32 = arith.constant 0 : i32
    %c0_i32_0 = arith.constant 0 : i32
    return %c0_i32, %arg0 : i32, i32
  }
  func.func @transform_2(%arg0: i32) -> (i32, i32) {
    %c0_i32 = arith.constant 0 : i32
    %c0_i32_0 = arith.constant 0 : i32
    %c0_i32_1 = arith.constant 0 : i32
    return %c0_i32, %c0_i32_0 : i32, i32
  }
  func.func @transform_3(%arg0: i32) -> (i32, i32) {
    %c0_i32 = arith.constant 0 : i32
    %c0_i32_0 = arith.constant 0 : i32
    %c0_i32_1 = arith.constant 0 : i32
    return %c0_i32, %c0_i32_0 : i32, i32
  }
  func.func @transform_4(%arg0: i32) -> (i32, i32) {
    %c0_i32 = arith.constant 0 : i32
    %c0_i32_0 = arith.constant 0 : i32
    %c0_i32_1 = arith.constant 0 : i32
    return %c0_i32, %c0_i32_0 : i32, i32
  }
  func.func @transform_5(%arg0: i32) -> (i32, i32) {
    %c0_i32 = arith.constant 0 : i32
    %c0_i32_0 = arith.constant 0 : i32
    return %c0_i32, %arg0 : i32, i32
  }
}

</mosaic_0001>

<llo_original>
// kernel: _fused_forward.1
$region0: #{_fused_forward.1}
  #allocation0 [shape = 'u32[]', space=smem, size = 0x4, offset = 0x4, fixed_abs, tag = 'smem constant byte address 0x4 - core index']
  #allocation1 [shape = 'u32[144,128]{1,0:T(1,128)}', space=vmem, size = 0x12000, scoped, tag = 'internal scratch']
  #allocation2 [shape = 'f32[1,1]{1,0:T(1,128)S(6)}', space=smem, size = 0x200, scoped, tag = 'scoped memory for _fused_forward.1']
  %s0 = inlined_call_operand.vmem [shape: bf16[256,32], index: 0, kind: input, shape index: {}]
  %s1 = inlined_call_operand.vmem [shape: f32[1,256], index: 1, kind: input, shape index: {}]
  %s2 = inlined_call_operand.vmem [shape: bf16[32,32], index: 2, kind: input, shape index: {}]
  %s3 = inlined_call_operand.vmem [shape: f32[32,8], index: 3, kind: input, shape index: {}]
  %s4 = inlined_call_operand.<no memory space> [shape: f32[1,1], index: 4, kind: input, shape index: {}]
  %s5 = inlined_call_operand.vmem [shape: f32[8,256], index: 5, kind: output, shape index: {}]
  %s6 = sld [smem:[#allocation0]]
  $region53: #{_fused_forward.1} parent=0
    _
  %s8 = ssub.s32 1, %s6
  %s9 = scalar_select 0, %s8, %s6
  %10 = sst [smem:[#allocation2]] %s4
  loop: start=0, step=1, limit=4
  $region2: #{_fused_forward.1} parent=0 // loop_pre_header
    _
  $region3: #{_fused_forward.1} parent=0 // loop_header
    %s12 = sphi 0, %s16
    %p13 = scmp.ge.s32.totalorder %s12, 4
    %s22 = sphi 0, %s24
    %s25 = sphi 0, %s22
    %s26 = sphi 0, %s25
    %s42 = sphi 0, %s26
    %s48 = sphi 0, %s50
    %s51 = sphi 0, %s48
    %s52 = sphi 0, %s51
    %s68 = sphi 0, %s52
    %s72 = sphi 0, %s72
    %s74 = sphi 0, %s72
    %s75 = sphi 0, %s74
    %s89 = sphi 0, %s75
    %s93 = sphi 0, %s93
    %s95 = sphi 0, %s93
    %s96 = sphi 0, %s95
    %s110 = sphi 0, %s96
    %s114 = sphi 0, %s114
    %s116 = sphi 0, %s114
    %s117 = sphi 0, %s116
    %s131 = sphi 0, %s117
    %s137 = sphi 0, %s139
    %s140 = sphi 0, %s137
    %s141 = sphi 0, %s140
    %s157 = sphi 0, %s141
  $region4: #{_fused_forward.1} parent=0 // loop_header_branch
    %15 = sbr.rel (%p13) target = $region8
  $region5: #{_fused_forward.1} parent=0 // loop_body
    %s17 = ssub.s32 %s12, 1
    %s18 = ssub.s32 %s12, 2
    %s19 = sadd.s32 %s12, 1
    %s20 = ssub.s32 %s12, %s19
    %p21 = scmp.eq.s32.totalorder %s20, 0
    %s23 = sadd.s32 %s22, 1
    %s24 = scalar_select %p21, %s22, %s23
    %p27 = pneg %p21
    %p28 = scmp.eq.s32.totalorder %s12, 1
    %p29 = por %p27, %p28
    %p30 = scmp.ne.s32.totalorder %s22, %s25
    %p31 = scmp.eq.s32.totalorder %s12, 0
    %p32 = por %p30, %p31
    %p33 = scmp.ne.s32.totalorder %s22, %s25
    %p34 = scmp.eq.s32.totalorder %s17, 1
    %p35 = por %p33, %p34
    %p36 = scmp.ne.s32.totalorder %s25, %s26
    %p37 = scmp.eq.s32.totalorder %s17, 0
    %p38 = por %p36, %p37
    %p39 = scmp.ne.s32.totalorder %s25, %s26
    %p40 = scmp.eq.s32.totalorder %s18, 1
    %p41 = por %p39, %p40
    %p43 = scmp.ne.s32.totalorder %s26, %s42
    %p44 = scmp.eq.s32.totalorder %s18, 0
    %p45 = por %p43, %p44
    %s46 = ssub.s32 %s12, %s19
    %p47 = scmp.eq.s32.totalorder %s46, 0
    %s49 = sadd.s32 %s48, 1
    %s50 = scalar_select %p47, %s48, %s49
    %p53 = pneg %p47
    %p54 = scmp.eq.s32.totalorder %s12, 1
    %p55 = por %p53, %p54
    %p56 = scmp.ne.s32.totalorder %s48, %s51
    %p57 = scmp.eq.s32.totalorder %s12, 0
    %p58 = por %p56, %p57
    %p59 = scmp.ne.s32.totalorder %s48, %s51
    %p60 = scmp.eq.s32.totalorder %s17, 1
    %p61 = por %p59, %p60
    %p62 = scmp.ne.s32.totalorder %s51, %s52
    %p63 = scmp.eq.s32.totalorder %s17, 0
    %p64 = por %p62, %p63
    %p65 = scmp.ne.s32.totalorder %s51, %s52
    %p66 = scmp.eq.s32.totalorder %s18, 1
    %p67 = por %p65, %p66
    %p69 = scmp.ne.s32.totalorder %s52, %s68
    %p70 = scmp.eq.s32.totalorder %s18, 0
    %p71 = por %p69, %p70
    %s73 = sadd.s32 %s72, 1
    %p76 = scmp.eq.s32.totalorder %s12, 1
    %p77 = scmp.ne.s32.totalorder %s72, %s74
    %p78 = scmp.eq.s32.totalorder %s12, 0
    %p79 = por %p77, %p78
    %p80 = scmp.ne.s32.totalorder %s72, %s74
    %p81 = scmp.eq.s32.totalorder %s17, 1
    %p82 = por %p80, %p81
    %p83 = scmp.ne.s32.totalorder %s74, %s75
    %p84 = scmp.eq.s32.totalorder %s17, 0
    %p85 = por %p83, %p84
    %p86 = scmp.ne.s32.totalorder %s74, %s75
    %p87 = scmp.eq.s32.totalorder %s18, 1
    %p88 = por %p86, %p87
    %p90 = scmp.ne.s32.totalorder %s75, %s89
    %p91 = scmp.eq.s32.totalorder %s18, 0
    %p92 = por %p90, %p91
    %s94 = sadd.s32 %s93, 1
    %p97 = scmp.eq.s32.totalorder %s12, 1
    %p98 = scmp.ne.s32.totalorder %s93, %s95
    %p99 = scmp.eq.s32.totalorder %s12, 0
    %p100 = por %p98, %p99
    %p101 = scmp.ne.s32.totalorder %s93, %s95
    %p102 = scmp.eq.s32.totalorder %s17, 1
    %p103 = por %p101, %p102
    %p104 = scmp.ne.s32.totalorder %s95, %s96
    %p105 = scmp.eq.s32.totalorder %s17, 0
    %p106 = por %p104, %p105
    %p107 = scmp.ne.s32.totalorder %s95, %s96
    %p108 = scmp.eq.s32.totalorder %s18, 1
    %p109 = por %p107, %p108
    %p111 = scmp.ne.s32.totalorder %s96, %s110
    %p112 = scmp.eq.s32.totalorder %s18, 0
    %p113 = por %p111, %p112
    %s115 = sadd.s32 %s114, 1
    %p118 = scmp.eq.s32.totalorder %s12, 1
    %p119 = scmp.ne.s32.totalorder %s114, %s116
    %p120 = scmp.eq.s32.totalorder %s12, 0
    %p121 = por %p119, %p120
    %p122 = scmp.ne.s32.totalorder %s114, %s116
    %p123 = scmp.eq.s32.totalorder %s17, 1
    %p124 = por %p122, %p123
    %p125 = scmp.ne.s32.totalorder %s116, %s117
    %p126 = scmp.eq.s32.totalorder %s17, 0
    %p127 = por %p125, %p126
    %p128 = scmp.ne.s32.totalorder %s116, %s117
    %p129 = scmp.eq.s32.totalorder %s18, 1
    %p130 = por %p128, %p129
    %p132 = scmp.ne.s32.totalorder %s117, %s131
    %p133 = scmp.eq.s32.totalorder %s18, 0
    %p134 = por %p132, %p133
    %s135 = ssub.s32 %s12, %s19
    %p136 = scmp.eq.s32.totalorder %s135, 0
    %s138 = sadd.s32 %s137, 1
    %s139 = scalar_select %p136, %s137, %s138
    %p142 = pneg %p136
    %p143 = scmp.eq.s32.totalorder %s12, 1
    %p144 = por %p142, %p143
    %p145 = scmp.ne.s32.totalorder %s137, %s140
    %p146 = scmp.eq.s32.totalorder %s12, 0
    %p147 = por %p145, %p146
    %p148 = scmp.ne.s32.totalorder %s137, %s140
    %p149 = scmp.eq.s32.totalorder %s17, 1
    %p150 = por %p148, %p149
    %p151 = scmp.ne.s32.totalorder %s140, %s141
    %p152 = scmp.eq.s32.totalorder %s17, 0
    %p153 = por %p151, %p152
    %p154 = scmp.ne.s32.totalorder %s140, %s141
    %p155 = scmp.eq.s32.totalorder %s18, 1
    %p156 = por %p154, %p155
    %p158 = scmp.ne.s32.totalorder %s141, %s157
    %p159 = scmp.eq.s32.totalorder %s18, 0
    %p160 = por %p158, %p159
    %p161 = scmp.le.s32.totalorder 1, %s12
    %p162 = scmp.lt.s32.totalorder %s12, 3
    %p163 = pnand %p161, %p162
    %p164 = pneg %p163
    // Predicated region
    $region9: #{_fused_forward.1} parent=5 // pred_check
      _
    $region10: #{_fused_forward.1} parent=5 // pred_check_branch
      %166 = sbr.rel (%p163) target = $region12
    $region11: #{_fused_forward.1} parent=5 // pred_region
      %s167 = ssub.s32 %s12, 1
      // Predicated region
      $region13: #{_fused_forward.1} parent=11 // pred_check
        %p168 = pneg %p85
      $region14: #{_fused_forward.1} parent=11 // pred_check_branch
        %170 = sbr.rel (%p168) target = $region16
      $region15: #{_fused_forward.1} parent=11 // pred_region
        _
      $region16: #{_fused_forward.1} parent=11 // pred_fallthru
        _
      // Predicated region
      $region17: #{_fused_forward.1} parent=11 // pred_check
        %p171 = pneg %p106
      $region18: #{_fused_forward.1} parent=11 // pred_check_branch
        %173 = sbr.rel (%p171) target = $region20
      $region19: #{_fused_forward.1} parent=11 // pred_region
        _
      $region20: #{_fused_forward.1} parent=11 // pred_fallthru
        _
      // Predicated region
      $region21: #{_fused_forward.1} parent=11 // pred_check
        %p174 = pneg %p127
      $region22: #{_fused_forward.1} parent=11 // pred_check_branch
        %176 = sbr.rel (%p174) target = $region24
      $region23: #{_fused_forward.1} parent=11 // pred_region
        _
      $region24: #{_fused_forward.1} parent=11 // pred_fallthru
        _
    $region12: #{_fused_forward.1} parent=5 // pred_fallthru
      _
    %p177 = scmp.lt.s32.totalorder %s12, 2
    // Predicated region
    $region25: #{_fused_forward.1} parent=5 // pred_check
      %p178 = pneg %p177
    $region26: #{_fused_forward.1} parent=5 // pred_check_branch
      %180 = sbr.rel (%p178) target = $region28
    $region27: #{_fused_forward.1} parent=5 // pred_region
      // Predicated region
      $region29: #{_fused_forward.1} parent=27 // pred_check
        %p181 = pneg %p32
      $region30: #{_fused_forward.1} parent=27 // pred_check_branch
        %183 = sbr.rel (%p181) target = $region32
      $region31: #{_fused_forward.1} parent=27 // pred_region
        %s184 = smul.u32 16, %s12
        %p185 = scmp.lt.s32.totalorder %s184, 31
        %s186 = scalar_select %p185, %s184, 31
        %s187 = smul.addr %s186, 4
        %s188 = scalar_lea.vmem %s0, %s187
        %s189 = smul.u32 16, %s12
      $region32: #{_fused_forward.1} parent=27 // pred_fallthru
        _
      // Predicated region
      $region33: #{_fused_forward.1} parent=27 // pred_check
        %p190 = pneg %p58
      $region34: #{_fused_forward.1} parent=27 // pred_check_branch
        %192 = sbr.rel (%p190) target = $region36
      $region35: #{_fused_forward.1} parent=27 // pred_region
        %p193 = scmp.lt.s32.totalorder %s12, 1
        %s194 = scalar_select %p193, %s12, 1
        %s195 = scalar_lea.vmem %s1, %s194
      $region36: #{_fused_forward.1} parent=27 // pred_fallthru
        _
    $region28: #{_fused_forward.1} parent=5 // pred_fallthru
      _
    %p196 = scmp.le.s32.totalorder 1, %s12
    %p197 = scmp.lt.s32.totalorder %s12, 3
    %p198 = pnand %p196, %p197
    %p199 = pneg %p198
    // Predicated region
    $region37: #{_fused_forward.1} parent=5 // pred_check
      _
    $region38: #{_fused_forward.1} parent=5 // pred_check_branch
      %201 = sbr.rel (%p198) target = $region40
    $region39: #{_fused_forward.1} parent=5 // pred_region
      %s202 = ssub.s32 %s12, 1
      %s203 = smul.u32 16, %s17
      %p204 = scmp.lt.s32.totalorder %s203, 31
      %s205 = scalar_select %p204, %s203, 31
      %s206 = smul.addr %s205, 4
      %s207 = scalar_lea.vmem %s0, %s206
      %p208 = pneg %p38
      %p209 = pneg %p35
      %p210 = scmp.lt.s32.totalorder %s17, 1
      %s211 = scalar_select %p210, %s17, 1
      %s212 = scalar_lea.vmem %s1, %s211
      %p213 = pneg %p64
      %p214 = pneg %p61
      %p215 = pneg %p85
      %p216 = pneg %p82
      %p217 = pneg %p106
      %p218 = pneg %p103
      %p219 = pneg %p127
      %p220 = pneg %p124
      %p221 = pneg %p153
      %p222 = pneg %p150
      %p223 = scmp.lt.s32.totalorder %s17, 1
      %s224 = scalar_select %p223, %s17, 1
      %s225 = smul.addr %s224, 8
      %s226 = scalar_lea.vmem %s5, %s225
      %s227 = smul.u32 16, %s17
      %p228 = scmp.lt.s32.totalorder %s227, 31
      %s229 = scalar_select %p228, %s227, 31
      %s230 = smul.addr %s229, 4
      %s231 = scalar_lea.vmem %s0, %s230
      %s232 = smul.u32 16, %s17
      %p233 = scmp.lt.s32.totalorder %s17, 1
      %s234 = scalar_select %p233, %s17, 1
      %s235 = scalar_lea.vmem %s1, %s234
      %p236 = scmp.lt.s32.totalorder %s17, 1
      %s237 = scalar_select %p236, %s17, 1
      %s238 = smul.addr %s237, 8
      %s239 = scalar_lea.vmem %s5, %s238
      %v241 = vld [vmem:[%s231] sm:$0xf]
      %v242 = vld [vmem:[%s231 + $0x4] sm:$0xf]
      %v243 = vld [vmem:[%s231 + $0x8] sm:$0xf]
      %v244 = vld [vmem:[%s231 + $0xc] sm:$0xf]
      %v245 = vld [vmem:[%s231 + $0x10] sm:$0xf]
      %v246 = vld [vmem:[%s231 + $0x14] sm:$0xf]
      %v247 = vld [vmem:[%s231 + $0x18] sm:$0xf]
      %v248 = vld [vmem:[%s231 + $0x1c] sm:$0xf]
      %v249 = vld [vmem:[%s231 + $0x20] sm:$0xf]
      %v250 = vld [vmem:[%s231 + $0x24] sm:$0xf]
      %v251 = vld [vmem:[%s231 + $0x28] sm:$0xf]
      %v252 = vld [vmem:[%s231 + $0x2c] sm:$0xf]
      %v253 = vld [vmem:[%s231 + $0x30] sm:$0xf]
      %v254 = vld [vmem:[%s231 + $0x34] sm:$0xf]
      %v255 = vld [vmem:[%s231 + $0x38] sm:$0xf]
      %v256 = vld [vmem:[%s231 + $0x3c] sm:$0xf]
      %v257 = vld [vmem:[%s3] sm:$0xff]
      %v258 = vld [vmem:[%s3 + $0x8] sm:$0xff]
      %v259 = vld [vmem:[%s3 + $0x10] sm:$0xff]
      %v260 = vld [vmem:[%s3 + $0x18] sm:$0xff]
      %v261 = vld [vmem:[%s2] sm:$0xf]
      %v262 = vld [vmem:[%s2 + $0x4] sm:$0xf]
      %v263 = vld [vmem:[%s2 + $0x8] sm:$0xf]
      %v264 = vld [vmem:[%s2 + $0xc] sm:$0xf]
      %266 = vset.pattern.permute.xlu0 0
      %267 = vperm.xlu0 %266, %v257
      %v268 = vpop.permute.xlu0 %267
      %271 = vset.pattern.permute.xlu0 0
      %272 = vperm.xlu0 %271, %v258
      %v273 = vpop.permute.xlu0 %272
      %276 = vset.pattern.permute.xlu0 0
      %277 = vperm.xlu0 %276, %v259
      %v278 = vpop.permute.xlu0 %277
      %281 = vset.pattern.permute.xlu0 0
      %282 = vperm.xlu0 %281, %v260
      %v283 = vpop.permute.xlu0 %282
      %v289 = vunpack.c.l.b16 %v261
      %v290 = vunpack.c.l.b16 %v262
      %v291 = vunpack.c.l.b16 %v263
      %v292 = vunpack.c.l.b16 %v264
      %v293 = vpack.c.b16 %v290, %v289
      %v294 = vpack.c.b16 %v292, %v291
      %v311 = vunpack.c.l.b16 %v241
      %v312 = vunpack.c.l.b16 %v242
      %v313 = vunpack.c.l.b16 %v243
      %v314 = vunpack.c.l.b16 %v244
      %v315 = vunpack.c.l.b16 %v245
      %v316 = vunpack.c.l.b16 %v246
      %v317 = vunpack.c.l.b16 %v247
      %v318 = vunpack.c.l.b16 %v248
      %v319 = vunpack.c.l.b16 %v249
      %v320 = vunpack.c.l.b16 %v250
      %v321 = vunpack.c.l.b16 %v251
      %v322 = vunpack.c.l.b16 %v252
      %v323 = vunpack.c.l.b16 %v253
      %v324 = vunpack.c.l.b16 %v254
      %v325 = vunpack.c.l.b16 %v255
      %v326 = vunpack.c.l.b16 %v256
      %v327 = vpack.c.b16 %v312, %v311
      %v328 = vpack.c.b16 %v314, %v313
      %v329 = vpack.c.b16 %v316, %v315
      %v330 = vpack.c.b16 %v318, %v317
      %v331 = vpack.c.b16 %v320, %v319
      %v332 = vpack.c.b16 %v322, %v321
      %v333 = vpack.c.b16 %v324, %v323
      %v334 = vpack.c.b16 %v326, %v325
      %vm335 = vcmask 261120
      %v337 = vsel %vm335, %v293, 0
      %v340 = vsel %vm335, %v294, 0
      %v343 = vsel %vm335, %v327, 0
      %v346 = vsel %vm335, %v328, 0
      %v349 = vsel %vm335, %v329, 0
      %v352 = vsel %vm335, %v330, 0
      %v355 = vsel %vm335, %v331, 0
      %v358 = vsel %vm335, %v332, 0
      %v361 = vsel %vm335, %v333, 0
      %v364 = vsel %vm335, %v334, 0
      %366 = vmatprep.subr.bf16.mxu0 0
      %367 = vmatpush1.bf16.xpose.msra.mxu0 %v364
      %368 = vmatprep.subr.bf16.mxu0 0
      %369 = vmatpush1.bf16.xpose.msra.mxu0 %v361
      %370 = vmatprep.subr.bf16.mxu0 0
      %371 = vmatpush1.bf16.xpose.msra.mxu0 %v358
      %372 = vmatprep.subr.bf16.mxu0 0
      %373 = vmatpush1.bf16.xpose.msra.mxu0 %v355
      %374 = vmatprep.subr.bf16.mxu0 0
      %375 = vmatpush1.bf16.xpose.msra.mxu0 %v352
      %376 = vmatprep.subr.bf16.mxu0 0
      %377 = vmatpush1.bf16.xpose.msra.mxu0 %v349
      %378 = vmatprep.subr.bf16.mxu0 0
      %379 = vmatpush1.bf16.xpose.msra.mxu0 %v346
      %380 = vmatprep.subr.bf16.mxu0 0
      %381 = vmatpush1.bf16.xpose.msra.mxu0 %v343
      %382 = vmatprep.subr.bf16.mxu0 0
      %383 = vmatpush2.bf16.xpose.msra.mxu0 0
      %384 = vmatprep.subr.bf16.mxu0 0
      %385 = vmatpush2.bf16.xpose.msra.mxu0 0
      %386 = vmatprep.subr.bf16.mxu0 0
      %387 = vmatpush2.bf16.xpose.msra.mxu0 0
      %388 = vmatprep.subr.bf16.mxu0 0
      %389 = vmatpush2.bf16.xpose.msra.mxu0 0
      %390 = vmatprep.subr.bf16.mxu0 0
      %391 = vmatpush2.bf16.xpose.msra.mxu0 0
      %392 = vmatprep.subr.bf16.mxu0 0
      %393 = vmatpush2.bf16.xpose.msra.mxu0 0
      %394 = vmatprep.subr.bf16.mxu0 0
      %395 = vmatpush2.bf16.xpose.msra.mxu0 0
      %396 = vmatprep.subr.bf16.mxu0 0
      %397 = vmatpush2.bf16.xpose.msra.mxu0 0
      %398 = vmatprep.mubr.bf16.mxu0 0
      %399 = vmatmul.mubr.bf16.gmra.mxu0 %v337
      %v400 = vpop.f32.mrf.mxu0
      %v401 = vadd.f32 %v268, %v400
      %v402 = vpop.f32.mrf.mxu0
      %v403 = vpop.f32.mrf.mxu0
      %v404 = vadd.f32 %v273, %v403
      %v405 = vpop.f32.mrf.mxu0
      %406 = vmatprep.mubr.bf16.mxu0 0
      %407 = vmatmul.mubr.bf16.gmra.mxu0 %v340
      %v408 = vpop.f32.mrf.mxu0
      %v409 = vadd.f32 %v278, %v408
      %v410 = vpop.f32.mrf.mxu0
      %v411 = vpop.f32.mrf.mxu0
      %v412 = vadd.f32 %v283, %v411
      %v413 = vpop.f32.mrf.mxu0
      %414 = vdwg.mxu0
      %v415 = vmul.f32 %v401, 0.5
      %v416 = vmul.f32 %v404, 0.5
      %v417 = vmul.f32 %v409, 0.5
      %v418 = vmul.f32 %v412, 0.5
      %v419 = vmul.f32 %v401, 0.044715
      %v420 = vmul.f32 %v404, 0.044715
      %v421 = vmul.f32 %v409, 0.044715
      %v422 = vmul.f32 %v412, 0.044715
      %v423 = vmul.f32 %v419, %v401
      %v424 = vmul.f32 %v420, %v404
      %v425 = vmul.f32 %v421, %v409
      %v426 = vmul.f32 %v422, %v412
      %v427 = vmul.f32 %v423, %v401
      %v428 = vmul.f32 %v424, %v404
      %v429 = vmul.f32 %v425, %v409
      %v430 = vmul.f32 %v426, %v412
      %v431 = vadd.f32 %v401, %v427
      %v432 = vadd.f32 %v404, %v428
      %v433 = vadd.f32 %v409, %v429
      %v434 = vadd.f32 %v412, %v430
      %v435 = vmul.f32 %v431, 0.7978846
      %v436 = vmul.f32 %v432, 0.7978846
      %v437 = vmul.f32 %v433, 0.7978846
      %v438 = vmul.f32 %v434, 0.7978846
      %v439 = vtanh.pop %v435
      %v440 = vtanh.pop %v436
      %v441 = vtanh.pop %v437
      %v442 = vtanh.pop %v438
      %v443 = vadd.f32 %v439, 1.0
      %v444 = vadd.f32 %v440, 1.0
      %v445 = vadd.f32 %v441, 1.0
      %v446 = vadd.f32 %v442, 1.0
      %v447 = vmul.f32 %v415, %v443
      %v448 = vmul.f32 %v416, %v444
      %v449 = vmul.f32 %v417, %v445
      %v450 = vmul.f32 %v418, %v446
      %v451 = vadd.f32 %v447, %v448
      %v452 = vadd.f32 %v451, %v449
      %v453 = vadd.f32 %v452, %v450
      %v454 = vrot.slane %v453, 4
      %v455 = vadd.f32 %v453, %v454
      %v456 = vrot.slane %v455, 2
      %v457 = vadd.f32 %v455, %v456
      %v458 = vrot.slane %v457, 1
      %v459 = vadd.f32 %v457, %v458
      %v460 = vmul.f32 %v459, 0.03125
      %v461 = vmul.f32 %v447, %v447
      %v462 = vmul.f32 %v448, %v448
      %v463 = vmul.f32 %v449, %v449
      %v464 = vmul.f32 %v450, %v450
      %v465 = vadd.f32 %v461, %v462
      %v466 = vadd.f32 %v465, %v463
      %v467 = vadd.f32 %v466, %v464
      %v468 = vrot.slane %v467, 4
      %v469 = vadd.f32 %v467, %v468
      %v470 = vrot.slane %v469, 2
      %v471 = vadd.f32 %v469, %v470
      %v472 = vrot.slane %v471, 1
      %v473 = vadd.f32 %v471, %v472
      %v474 = vmul.f32 %v473, 0.03125
      %475 = vset.pattern.permute.xlu0 1
      %476 = vperm.xlu0 %475, %v257
      %v477 = vpop.permute.xlu0 %476
      %479 = vset.pattern.permute.xlu0 1
      %480 = vperm.xlu0 %479, %v258
      %v481 = vpop.permute.xlu0 %480
      %483 = vset.pattern.permute.xlu0 1
      %484 = vperm.xlu0 %483, %v259
      %v485 = vpop.permute.xlu0 %484
      %487 = vset.pattern.permute.xlu0 1
      %488 = vperm.xlu0 %487, %v260
      %v489 = vpop.permute.xlu0 %488
      %v491 = vmul.f32 %v477, %v447
      %v492 = vmul.f32 %v481, %v448
      %v493 = vmul.f32 %v485, %v449
      %v494 = vmul.f32 %v489, %v450
      %v495 = vadd.f32 %v491, %v492
      %v496 = vadd.f32 %v495, %v493
      %v497 = vadd.f32 %v496, %v494
      %v498 = vrot.slane %v497, 4
      %v499 = vadd.f32 %v497, %v498
      %v500 = vrot.slane %v499, 2
      %v501 = vadd.f32 %v499, %v500
      %v502 = vrot.slane %v501, 1
      %v503 = vadd.f32 %v501, %v502
      %v504 = vmul.f32 %v460, %v460
      %v505 = vsub.f32 %v474, %v504
      %v506 = vadd.f32 %v505, 1e-05
      %v507 = vrsqrt.pop %v506
      %v508 = vmul.f32 %v507, %v503
      %s509 = sld [smem:[#allocation2]]
      %v510 = vstv %s509
      %v511 = vadd.f32 %v508, %v510
      %v512 = vmax.f32 %v511, 0.0
      %v513 = vand.u32 2147483647, %v511
      %v514 = vsub.f32 0.0, %v513
      %v515 = vmul.f32 %v514, 1.442695
      %v516 = vpow.pop %v515
      %v517 = vadd.f32 %v516, 1.0
      %v518 = vlog2.pop %v517
      %v519 = vmul.f32 %v518, 0.6931472
      %v520 = vadd.f32 %v512, %v519
      %v521 = vsub.f32 %v511, %v520
      %v522 = vsub.f32 0.0, %v520
      %v523 = vld [vmem:[%s235] sm:$0x1]
      %vm524 = vcmp.ge.f32.partialorder %v523, 4.0
      %v525 = vsel %vm524, 1, 0
      %v526 = vcvt.s32.f32 %v525
      %v527 = vmul.f32 %v526, 4.0
      %v528 = vsub.f32 %v523, %v527
      %vm529 = vcmp.ge.f32.partialorder %v528, 2.0
      %v530 = vsel %vm529, 1, 0
      %v531 = vcvt.s32.f32 %v530
      %v532 = vmul.f32 %v531, 2.0
      %v533 = vsub.f32 %v528, %v532
      %vm534 = vcmp.ge.f32.partialorder %v533, 1.0
      %v535 = vsel %vm534, 1, 0
      %v536 = vcvt.s32.f32 %v535
      %v537 = vmul.f32 %v522, %v536
      %v538 = vmul.f32 %v521, %v536
      %v539 = vmul.f32 %v522, %v531
      %v540 = vmul.f32 %v521, %v531
      %vm541 = vmand %vm524, %vm534
      %v542 = vsel %vm541, %v538, %v537
      %vm543 = vmand %vm524, %vm529
      %v544 = vsel %vm543, %v540, %v539
      %v545 = vadd.f32 %v542, %v544
      %v546 = vsub.f32 0.0, %v545
      %v548 = vrot.slane %v538, 7
      %v551 = vrot.slane %v539, 6
      %v554 = vrot.slane %v540, 5
      %v557 = vlaneseq
      %v558 = vshrl.u32 %v557, 7
      %v559 = vsub.s32 0, %v558
      %v560 = vrot.slane %v546, %v559
      %vm562 = vcmask 1040384
      %v563 = vsel %vm562, %v537, %v548
      %vm564 = vcmask 1041408
      %v565 = vsel %vm564, %v563, %v551
      %vm566 = vcmask 1042432
      %v567 = vsel %vm566, %v565, %v554
      %vm568 = vcmask 1043456
      %v569 = vsel %vm568, %v567, %v560
      %vm570 = vcmask 1044480
      %v571 = vsel %vm570, %v569, 0.0
      %vm572 = vcmask 1045504
      %v573 = vsel %vm572, %v571, 0.0
      %vm574 = vcmask 1046528
      %v575 = vsel %vm574, %v573, 0.0
      %576 = vst [vmem:[%s239] sm:$0xff] %v575
      %p577 = scmp.lt.s32.totalorder %s17, 1
      %s578 = scalar_select %p577, %s17, 1
      %s579 = smul.addr %s578, 8
      %s580 = scalar_lea.vmem %s5, %s579
      // Predicated region
      $region41: #{_fused_forward.1} parent=39 // pred_check
        %p581 = pneg %p150
      $region42: #{_fused_forward.1} parent=39 // pred_check_branch
        %583 = sbr.rel (%p581) target = $region44
      $region43: #{_fused_forward.1} parent=39 // pred_region
        _
      $region44: #{_fused_forward.1} parent=39 // pred_fallthru
        _
    $region40: #{_fused_forward.1} parent=5 // pred_fallthru
      _
    %p584 = scmp.le.s32.totalorder 2, %s12
    // Predicated region
    $region45: #{_fused_forward.1} parent=5 // pred_check
      %p585 = pneg %p584
    $region46: #{_fused_forward.1} parent=5 // pred_check_branch
      %587 = sbr.rel (%p585) target = $region48
    $region47: #{_fused_forward.1} parent=5 // pred_region
      %s588 = ssub.s32 %s12, 2
      // Predicated region
      $region49: #{_fused_forward.1} parent=47 // pred_check
        %p589 = pneg %p156
      $region50: #{_fused_forward.1} parent=47 // pred_check_branch
        %591 = sbr.rel (%p589) target = $region52
      $region51: #{_fused_forward.1} parent=47 // pred_region
        %p592 = scmp.lt.s32.totalorder %s18, 1
        %s593 = scalar_select %p592, %s18, 1
        %s594 = smul.addr %s593, 8
        %s595 = scalar_lea.vmem %s5, %s594
      $region52: #{_fused_forward.1} parent=47 // pred_fallthru
        _
    $region48: #{_fused_forward.1} parent=5 // pred_fallthru
      _
  $region6: #{_fused_forward.1} parent=0 // loop_footer
    %s16 = sadd.s32 1, %s12
  $region7: #{_fused_forward.1} parent=0 // loop_footer_branch
    %11 = sbr.rel target = $region3
  $region8: #{_fused_forward.1} parent=0 // loop_exit
    _

</llo_original>
